<compile_context>
chip_gen: v7x
topology: tpu7x:2x2x1
jax: 0.10.0
libtpu: 0.0.40
codegen_flags: <defaults>
</compile_context>

<pallas_src>
import jax
import jax.numpy as jnp
from jax.experimental import pallas as pl
from jax.experimental.pallas import tpu as pltpu

_ROW_TILE = 512  # rows per grid step when the flattened batch is large


def _mech_ss_kernel(x_ref, u_ref, w1_ref, b1_ref, w2_ref, b2_ref, out_ref):
    """One row-tile of the forward pass, entirely in VMEM (VPU + XLU only)."""
    x = x_ref[...]                      # [R, 2]  (position, velocity)
    u = u_ref[...]                      # [R, 1]
    w1 = w1_ref[...]                    # [3, F]  (W1^T, lane-padded)

    pos = x[:, 0:1]                     # [R, 1]
    vel = x[:, 1:2]                     # [R, 1]  (also output column 0)

    # Layer 1: xu @ W1^T + b1 without materializing the concat; K=3 expressed
    # as three lane-broadcast multiplies (cheaper than a K=3 MXU pass).
    h = (pos * w1[0:1, :] + vel * w1[1:2, :] + u * w1[2:3, :]
         + b1_ref[...])                 # [R, F]
    h = jnp.maximum(h, 0.0)

    # Layer 2 (+ folded 1/typical_ts): row vector W2/ts, lane reduction.
    dx_v = jnp.sum(h * w2_ref[...], axis=-1, keepdims=True) + b2_ref[...]  # [R,1]

    # dx = concat([vel, dx_v], -1) as a single full-width store.
    col = jax.lax.broadcasted_iota(jnp.int32, out_ref.shape, 1)
    out_ref[...] = jnp.where(col == 0, vel, dx_v).astype(out_ref.dtype)


def prepare_params(raw, typical_ts=1.0, lane_multiple=128):
    """One-time host-side prep: transpose, fold 1/typical_ts, lane-pad.

    raw uses PyTorch layouts: W1 [n_feat, 3], b1 [n_feat], W2 [1, n_feat], b2 [1].
    """
    W1 = jnp.asarray(raw["W1"], jnp.float32)
    b1 = jnp.asarray(raw["b1"], jnp.float32)
    W2 = jnp.asarray(raw["W2"], jnp.float32)
    b2 = jnp.asarray(raw["b2"], jnp.float32)
    n_feat = W1.shape[0]
    F = ((n_feat + lane_multiple - 1) // lane_multiple) * lane_multiple
    pad = F - n_feat
    return {
        "w1": jnp.pad(W1.T, ((0, 0), (0, pad))),                    # [3, F]
        "b1": jnp.pad(b1.reshape(1, n_feat), ((0, 0), (0, pad))),   # [1, F]
        "w2": jnp.pad(W2 / typical_ts, ((0, 0), (0, pad))),         # [1, F]
        "b2": (b2 / typical_ts).reshape(1, 1),                      # [1, 1]
    }


def _forward_rows(x2, u2, p):
    """x2: [R, 2], u2: [R, 1] -> dx: [R, 2]."""
    R, n_x = x2.shape
    n_u = u2.shape[-1]
    F = p["w1"].shape[-1]

    # Row padding: sublane multiple of 8; tile the grid for large row counts.
    R8 = max(8, -(-R // 8) * 8)
    if R8 <= _ROW_TILE:
        tile, Rp = R8, R8
    else:
        tile = _ROW_TILE
        Rp = -(-R8 // tile) * tile
    if Rp != R:
        x2 = jnp.pad(x2, ((0, Rp - R), (0, 0)))
        u2 = jnp.pad(u2, ((0, Rp - R), (0, 0)))

    out = pl.pallas_call(
        _mech_ss_kernel,
        out_shape=jax.ShapeDtypeStruct((Rp, n_x), jnp.float32),
        grid=(Rp // tile,),
        in_specs=[
            pl.BlockSpec((tile, n_x), lambda i: (i, 0)),   # x rows
            pl.BlockSpec((tile, n_u), lambda i: (i, 0)),   # u rows
            pl.BlockSpec((3, F), lambda i: (0, 0)),        # W1^T  (resident)
            pl.BlockSpec((1, F), lambda i: (0, 0)),        # b1    (resident)
            pl.BlockSpec((1, F), lambda i: (0, 0)),        # W2/ts (resident)
            pl.BlockSpec((1, 1), lambda i: (0, 0)),        # b2/ts (resident)
        ],
        out_specs=pl.BlockSpec((tile, n_x), lambda i: (i, 0)),
        compiler_params=pltpu.CompilerParams(
            dimension_semantics=("parallel",)),
    )(x2, u2, p["w1"], p["b1"], p["w2"], p["b2"])
    return out[:R] if Rp != R else out


def mechanical_ss_forward(in_x, in_u, prepared_params):
    """Forward pass. in_x: [..., 2], in_u: [..., 1] -> dx: [..., 2].

    Arbitrary leading dims (batch, or [T, B] teacher-forced trajectories) are
    flattened into rows and handled by a single pallas_call.
    """
    lead = in_x.shape[:-1]
    x2 = in_x.reshape(-1, in_x.shape[-1]).astype(jnp.float32)
    u2 = in_u.reshape(-1, in_u.shape[-1]).astype(jnp.float32)
    dx = _forward_rows(x2, u2, prepared_params)
    return dx.reshape(*lead, in_x.shape[-1])


def init_raw_params(key, n_feat=64, init_small=True):
    """PyTorch-layout parameters (biases randomized to exercise the bias path)."""
    std = 1e-3 if init_small else 1.0
    k1, k2, k3, k4 = jax.random.split(key, 4)
    return {
        "W1": std * jax.random.normal(k1, (n_feat, 3), jnp.float32),
        "b1": std * jax.random.normal(k2, (n_feat,), jnp.float32),
        "W2": std * jax.random.normal(k3, (1, n_feat), jnp.float32),
        "b2": std * jax.random.normal(k4, (1,), jnp.float32),
    }


def _reference(in_x, in_u, raw, typical_ts):
    """Pure-JAX mirror of the PyTorch forward."""
    xu = jnp.concatenate([in_x, in_u], axis=-1)
    h = jnp.maximum(xu @ raw["W1"].T + raw["b1"], 0.0)
    dx_v = (h @ raw["W2"].T + raw["b2"]) / typical_ts
    return jnp.concatenate([in_x[..., 1:2], dx_v], axis=-1)


if __name__ == "__main__":
    n_feat = 64
    typical_ts = 0.05
    B, T = 8, 16

    key = jax.random.PRNGKey(0)
    kp, kx, ku, kxs, kus = jax.random.split(key, 5)
    raw = init_raw_params(kp, n_feat=n_feat, init_small=True)
    prep = prepare_params(raw, typical_ts=typical_ts)

    # Single-step forward (matches one call of the PyTorch module).
    in_x = jax.random.normal(kx, (B, 2), jnp.float32)
    in_u = jax.random.normal(ku, (B, 1), jnp.float32)
    dx = mechanical_ss_forward(in_x, in_u, prep)
    jax.block_until_ready(dx)
    ref = _reference(in_x, in_u, raw, typical_ts)
    assert dx.shape == (B, 2)
    assert jnp.allclose(dx, ref, atol=1e-6, rtol=1e-5)

    # Teacher-forced trajectory: all T steps fused into one kernel launch,
    # weights DMA'd to VMEM once.
    x_seq = jax.random.normal(kxs, (T, B, 2), jnp.float32)
    u_seq = jax.random.normal(kus, (T, B, 1), jnp.float32)
    dx_seq = mechanical_ss_forward(x_seq, u_seq, prep)
    jax.block_until_ready(dx_seq)
    ref_seq = _reference(x_seq, u_seq, raw, typical_ts)
    assert dx_seq.shape == (T, B, 2)
    assert jnp.allclose(dx_seq, ref_seq, atol=1e-6, rtol=1e-5)

    print("KERNEL_OK")
</pallas_src>

<mosaic_0001>
module attributes {stable_mosaic.version = 11 : i64} {
  func.func @_mech_ss_kernel(%arg0: i32, %arg1: memref<8x2xf32, #tpu.memory_space<vmem>>, %arg2: memref<8x1xf32, #tpu.memory_space<vmem>>, %arg3: memref<3x128xf32, #tpu.memory_space<vmem>>, %arg4: memref<1x128xf32, #tpu.memory_space<vmem>>, %arg5: memref<1x128xf32, #tpu.memory_space<vmem>>, %arg6: memref<1x1xf32, #tpu.memory_space<vmem>>, %arg7: memref<8x2xf32, #tpu.memory_space<vmem>>) attributes {dimension_semantics = [#tpu.dimension_semantics<parallel>], iteration_bounds = array<i64: 1>, scalar_prefetch = 0 : i64, scratch_operands = 0 : i64, tpu.core_type = #tpu.core_type<tc>, window_params = [{transform_indices = @transform_0, window_bounds = array<i64: 8, 2>}, {transform_indices = @transform_1, window_bounds = array<i64: 8, 1>}, {pipeline_mode = #tpu.pipeline_mode<synchronous>, transform_indices = @transform_2, window_bounds = array<i64: 3, 128>}, {pipeline_mode = #tpu.pipeline_mode<synchronous>, transform_indices = @transform_3, window_bounds = array<i64: 1, 128>}, {pipeline_mode = #tpu.pipeline_mode<synchronous>, transform_indices = @transform_4, window_bounds = array<i64: 1, 128>}, {pipeline_mode = #tpu.pipeline_mode<synchronous>, transform_indices = @transform_5, window_bounds = array<i64: 1, 1>}, {transform_indices = @transform_6, window_bounds = array<i64: 8, 2>}]} {
    %c0 = arith.constant 0 : index
    %c0_0 = arith.constant 0 : index
    %0 = vector.load %arg1[%c0, %c0_0] : memref<8x2xf32, #tpu.memory_space<vmem>>, vector<8x2xf32>
    %c0_1 = arith.constant 0 : index
    %c0_2 = arith.constant 0 : index
    %1 = vector.load %arg2[%c0_1, %c0_2] : memref<8x1xf32, #tpu.memory_space<vmem>>, vector<8x1xf32>
    %c0_3 = arith.constant 0 : index
    %c0_4 = arith.constant 0 : index
    %2 = vector.load %arg3[%c0_3, %c0_4] : memref<3x128xf32, #tpu.memory_space<vmem>>, vector<3x128xf32>
    %3 = vector.extract_strided_slice %0 {offsets = [0, 0], sizes = [8, 1], strides = [1, 1]} : vector<8x2xf32> to vector<8x1xf32>
    %4 = vector.extract_strided_slice %0 {offsets = [0, 1], sizes = [8, 1], strides = [1, 1]} : vector<8x2xf32> to vector<8x1xf32>
    %5 = vector.extract_strided_slice %2 {offsets = [0, 0], sizes = [1, 128], strides = [1, 1]} : vector<3x128xf32> to vector<1x128xf32>
    %6 = vector.broadcast %3 : vector<8x1xf32> to vector<8x128xf32>
    %7 = vector.broadcast %5 : vector<1x128xf32> to vector<8x128xf32>
    %8 = arith.mulf %6, %7 : vector<8x128xf32>
    %9 = vector.extract_strided_slice %2 {offsets = [1, 0], sizes = [1, 128], strides = [1, 1]} : vector<3x128xf32> to vector<1x128xf32>
    %10 = vector.broadcast %4 : vector<8x1xf32> to vector<8x128xf32>
    %11 = vector.broadcast %9 : vector<1x128xf32> to vector<8x128xf32>
    %12 = arith.mulf %10, %11 : vector<8x128xf32>
    %13 = arith.addf %8, %12 : vector<8x128xf32>
    %14 = vector.extract_strided_slice %2 {offsets = [2, 0], sizes = [1, 128], strides = [1, 1]} : vector<3x128xf32> to vector<1x128xf32>
    %15 = vector.broadcast %1 : vector<8x1xf32> to vector<8x128xf32>
    %16 = vector.broadcast %14 : vector<1x128xf32> to vector<8x128xf32>
    %17 = arith.mulf %15, %16 : vector<8x128xf32>
    %18 = arith.addf %13, %17 : vector<8x128xf32>
    %c0_5 = arith.constant 0 : index
    %c0_6 = arith.constant 0 : index
    %19 = vector.load %arg4[%c0_5, %c0_6] : memref<1x128xf32, #tpu.memory_space<vmem>>, vector<1x128xf32>
    %20 = vector.broadcast %19 : vector<1x128xf32> to vector<8x128xf32>
    %21 = arith.addf %18, %20 : vector<8x128xf32>
    %cst = arith.constant 0.000000e+00 : f32
    %22 = vector.broadcast %cst : f32 to vector<8x128xf32>
    %23 = arith.maximumf %21, %22 : vector<8x128xf32>
    %c0_7 = arith.constant 0 : index
    %c0_8 = arith.constant 0 : index
    %24 = vector.load %arg5[%c0_7, %c0_8] : memref<1x128xf32, #tpu.memory_space<vmem>>, vector<1x128xf32>
    %25 = vector.broadcast %24 : vector<1x128xf32> to vector<8x128xf32>
    %26 = arith.mulf %23, %25 : vector<8x128xf32>
    %cst_9 = arith.constant dense<0.000000e+00> : vector<8xf32>
    %27 = vector.multi_reduction <add>, %26, %cst_9 [1] : vector<8x128xf32> to vector<8xf32>
    %28 = vector.shape_cast %27 : vector<8xf32> to vector<8x1xf32>
    %c0_10 = arith.constant 0 : index
    %c0_11 = arith.constant 0 : index
    %29 = vector.load %arg6[%c0_10, %c0_11] : memref<1x1xf32, #tpu.memory_space<vmem>>, vector<1x1xf32>
    %30 = vector.broadcast %29 : vector<1x1xf32> to vector<8x1xf32>
    %31 = arith.addf %28, %30 : vector<8x1xf32>
    %32 = tpu.iota {dimensions = array<i32: 1>} : vector<8x2xi32>
    %c0_i32 = arith.constant 0 : i32
    %33 = vector.broadcast %c0_i32 : i32 to vector<8x2xi32>
    %34 = arith.cmpi eq, %32, %33 : vector<8x2xi32>
    %35 = vector.shape_cast %4 : vector<8x1xf32> to vector<8x1xf32>
    %36 = vector.broadcast %35 : vector<8x1xf32> to vector<8x2xf32>
    %37 = vector.shape_cast %31 : vector<8x1xf32> to vector<8x1xf32>
    %38 = vector.broadcast %37 : vector<8x1xf32> to vector<8x2xf32>
    %39 = arith.select %34, %36, %38 : vector<8x2xi1>, vector<8x2xf32>
    %c0_12 = arith.constant 0 : index
    %c0_13 = arith.constant 0 : index
    %40 = vector.load %arg7[%c0_12, %c0_13] : memref<8x2xf32, #tpu.memory_space<vmem>>, vector<8x2xf32>
    tpu.vector_store %arg7[%c0_12, %c0_13], %39 {strides = array<i32>} : memref<8x2xf32, #tpu.memory_space<vmem>>, vector<8x2xf32>,
    return
  }
  func.func @transform_0(%arg0: i32) -> (i32, i32) {
    %c0_i32 = arith.constant 0 : i32
    %c0_i32_0 = arith.constant 0 : i32
    return %arg0, %c0_i32 : i32, i32
  }
  func.func @transform_1(%arg0: i32) -> (i32, i32) {
    %c0_i32 = arith.constant 0 : i32
    %c0_i32_0 = arith.constant 0 : i32
    return %arg0, %c0_i32 : i32, i32
  }
  func.func @transform_2(%arg0: i32) -> (i32, i32) {
    %c0_i32 = arith.constant 0 : i32
    %c0_i32_0 = arith.constant 0 : i32
    %c0_i32_1 = arith.constant 0 : i32
    return %c0_i32, %c0_i32_0 : i32, i32
  }
  func.func @transform_3(%arg0: i32) -> (i32, i32) {
    %c0_i32 = arith.constant 0 : i32
    %c0_i32_0 = arith.constant 0 : i32
    %c0_i32_1 = arith.constant 0 : i32
    return %c0_i32, %c0_i32_0 : i32, i32
  }
  func.func @transform_4(%arg0: i32) -> (i32, i32) {
    %c0_i32 = arith.constant 0 : i32
    %c0_i32_0 = arith.constant 0 : i32
    %c0_i32_1 = arith.constant 0 : i32
    return %c0_i32, %c0_i32_0 : i32, i32
  }
  func.func @transform_5(%arg0: i32) -> (i32, i32) {
    %c0_i32 = arith.constant 0 : i32
    %c0_i32_0 = arith.constant 0 : i32
    %c0_i32_1 = arith.constant 0 : i32
    return %c0_i32, %c0_i32_0 : i32, i32
  }
  func.func @transform_6(%arg0: i32) -> (i32, i32) {
    %c0_i32 = arith.constant 0 : i32
    %c0_i32_0 = arith.constant 0 : i32
    return %arg0, %c0_i32 : i32, i32
  }
}

</mosaic_0001>

<llo_original>
// kernel: tpu_custom_call.1
$region0: #{tpu_custom_call.1}
  #allocation0 [shape = 'u32[]', space=smem, size = 0x4, offset = 0x4, fixed_abs, tag = 'smem constant byte address 0x4 - core index']
  #allocation1 [shape = 'u32[144,128]{1,0:T(1,128)}', space=vmem, size = 0x12000, scoped, tag = 'internal scratch']
  #allocation2 [shape = 'f32[1,1]{1,0:T(1,128)S(1)}', space=vmem, size = 0x200, scoped, tag = 'scoped memory for tpu_custom_call.1']
  %s0 = inlined_call_operand.vmem [shape: f32[8,2], index: 0, kind: input, shape index: {}]
  %s1 = inlined_call_operand.vmem [shape: f32[8,1], index: 1, kind: input, shape index: {}]
  %s2 = inlined_call_operand.vmem [shape: f32[3,128], index: 2, kind: input, shape index: {}]
  %s3 = inlined_call_operand.vmem [shape: f32[1,128], index: 3, kind: input, shape index: {}]
  %s4 = inlined_call_operand.vmem [shape: f32[1,128], index: 4, kind: input, shape index: {}]
  %s5 = inlined_call_operand.<no memory space> [shape: f32[1,1], index: 5, kind: input, shape index: {}]
  %s6 = inlined_call_operand.vmem [shape: f32[8,2], index: 6, kind: output, shape index: {}]
  %s7 = sld [smem:[#allocation0]]
  $region34: #{tpu_custom_call.1} parent=0
    _
  %s9 = ssub.s32 1, %s7
  %s10 = scalar_select 0, %s9, %s7
  %v11 = vstv %s5
  %12 = vst [vmem:[#allocation2] sm:$0x1] %v11
  // Predicated region
  $region2: #{tpu_custom_call.1} parent=0 // pred_check
    _
  $region3: #{tpu_custom_call.1} parent=0 // pred_check_branch
    %14 = sbr.rel (0) target = $region5
  $region4: #{tpu_custom_call.1} parent=0 // pred_region
    _
  $region5: #{tpu_custom_call.1} parent=0 // pred_fallthru
    _
  // Predicated region
  $region6: #{tpu_custom_call.1} parent=0 // pred_check
    _
  $region7: #{tpu_custom_call.1} parent=0 // pred_check_branch
    %16 = sbr.rel (0) target = $region9
  $region8: #{tpu_custom_call.1} parent=0 // pred_region
    _
  $region9: #{tpu_custom_call.1} parent=0 // pred_fallthru
    _
  // Predicated region
  $region10: #{tpu_custom_call.1} parent=0 // pred_check
    _
  $region11: #{tpu_custom_call.1} parent=0 // pred_check_branch
    %18 = sbr.rel (0) target = $region13
  $region12: #{tpu_custom_call.1} parent=0 // pred_region
    _
  $region13: #{tpu_custom_call.1} parent=0 // pred_fallthru
    _
  // Predicated region
  $region14: #{tpu_custom_call.1} parent=0 // pred_check
    _
  $region15: #{tpu_custom_call.1} parent=0 // pred_check_branch
    %20 = sbr.rel (0) target = $region17
  $region16: #{tpu_custom_call.1} parent=0 // pred_region
    _
  $region17: #{tpu_custom_call.1} parent=0 // pred_fallthru
    _
  // Predicated region
  $region18: #{tpu_custom_call.1} parent=0 // pred_check
    _
  $region19: #{tpu_custom_call.1} parent=0 // pred_check_branch
    %22 = sbr.rel (0) target = $region21
  $region20: #{tpu_custom_call.1} parent=0 // pred_region
    _
  $region21: #{tpu_custom_call.1} parent=0 // pred_fallthru
    _
  // Predicated region
  $region22: #{tpu_custom_call.1} parent=0 // pred_check
    _
  $region23: #{tpu_custom_call.1} parent=0 // pred_check_branch
    %24 = sbr.rel (0) target = $region25
  $region24: #{tpu_custom_call.1} parent=0 // pred_region
    _
  $region25: #{tpu_custom_call.1} parent=0 // pred_fallthru
    _
  %v25 = vld [vmem:[%s0] sm:$0xff]
  %v26 = vld [vmem:[%s1] sm:$0xff]
  %v27 = vld [vmem:[%s2] sm:$0x7]
  %29 = vset.pattern.permute.xlu0 0
  %30 = vperm.xlu0 %29, %v25
  %v31 = vpop.permute.xlu0 %30
  %v33 = vlaneseq
  %v34 = vshrl.u32 %v33, 7
  %v35 = vsub.s32 0, %v34
  %v36 = vrot.slane %v27, %v35
  %v37 = vmul.f32 %v31, %v36
  %38 = vset.pattern.permute.xlu0 1
  %39 = vperm.xlu0 %38, %v25
  %v40 = vpop.permute.xlu0 %39
  %v42 = vlaneseq
  %v43 = vshrl.u32 %v42, 7
  %v44 = vsub.s32 1, %v43
  %v45 = vrot.slane %v27, %v44
  %v46 = vmul.f32 %v40, %v45
  %v47 = vadd.f32 %v37, %v46
  %49 = vset.pattern.permute.xlu0 0
  %50 = vperm.xlu0 %49, %v26
  %v51 = vpop.permute.xlu0 %50
  %v53 = vlaneseq
  %v54 = vshrl.u32 %v53, 7
  %v55 = vsub.s32 2, %v54
  %v56 = vrot.slane %v27, %v55
  %v57 = vmul.f32 %v51, %v56
  %v58 = vadd.f32 %v47, %v57
  %v59 = vld [vmem:[%s3] sm:$0x1]
  %v61 = vlaneseq
  %v62 = vshrl.u32 %v61, 7
  %v63 = vsub.s32 0, %v62
  %v64 = vrot.slane %v59, %v63
  %v66 = vadd.f32 %v58, %v64
  %v67 = vmax.f32 %v66, 0.0
  %v68 = vld [vmem:[%s4] sm:$0x1]
  %v70 = vlaneseq
  %v71 = vshrl.u32 %v70, 7
  %v72 = vsub.s32 0, %v71
  %v73 = vrot.slane %v68, %v72
  %v75 = vmul.f32 %v67, %v73
  %76 = vadd.xlane.f32.xlu0 %v75
  %v77 = vpop.xlane.xlu0 %76
  %v78 = vld [vmem:[#allocation2] sm:$0x1]
  %v80 = vlaneseq
  %v81 = vshrl.u32 %v80, 7
  %v82 = vsub.s32 0, %v81
  %v83 = vrot.slane %v78, %v82
  %v85 = vadd.f32 %v77, %v83
  %v86 = vlaneseq
  %v87 = vand.u32 %v86, 127
  %vm88 = vcmp.eq.s32.totalorder %v87, 0
  %90 = vset.pattern.permute.xlu0 0
  %91 = vperm.xlu0 %90, %v85
  %v92 = vpop.permute.xlu0 %91
  %v94 = vsel %vm88, %v40, %v92
  %vm95 = vcmask 15360
  %96 = vst.msk [vmem:[%s6] sm:$0xff] %vm95, %v94
  // Predicated region
  $region26: #{tpu_custom_call.1} parent=0 // pred_check
    _
  $region27: #{tpu_custom_call.1} parent=0 // pred_check_branch
    %98 = sbr.rel (0) target = $region29
  $region28: #{tpu_custom_call.1} parent=0 // pred_region
    _
  $region29: #{tpu_custom_call.1} parent=0 // pred_fallthru
    _
  // Predicated region
  $region30: #{tpu_custom_call.1} parent=0 // pred_check
    _
  $region31: #{tpu_custom_call.1} parent=0 // pred_check_branch
    %100 = sbr.rel (0) target = $region33
  $region32: #{tpu_custom_call.1} parent=0 // pred_region
    _
  $region33: #{tpu_custom_call.1} parent=0 // pred_fallthru
    _

</llo_original>
